<compile_context>
chip_gen: v7x
topology: tpu7x:2x2x1
jax: 0.10.0
libtpu: 0.0.40
codegen_flags: <defaults>
</compile_context>

<pallas_src>
import jax
import jax.numpy as jnp
from jax.experimental import pallas as pl
from jax.experimental.pallas import tpu as pltpu

_EPS = 1e-8


def _make_kernel(n_total: int, tile_n: int):
    """Kernel closure over the static global row count and N-tile size."""
    inv_n = 1.0 / float(n_total)

    def kernel(f_ref, c_ref, o_ref, acc_ref):
        step = pl.program_id(0)

        @pl.when(step == 0)
        def _init():
            acc_ref[...] = jnp.zeros_like(acc_ref)

        f = f_ref[...].astype(jnp.float32)          # (TN, D)
        c = c_ref[...].astype(jnp.float32)          # (TN, D) or (1, D) (broadcasts)

        dot = jnp.sum(f * c, axis=1, keepdims=True)     # (TN, 1)
        f_sq = jnp.sum(f * f, axis=1, keepdims=True)    # (TN, 1)
        c_sq = jnp.sum(c * c, axis=1, keepdims=True)    # (TN, 1) or (1, 1)

        # cos = dot / max(||f||*||c||, eps)  ==  dot * min(rsqrt(f_sq*c_sq), 1/eps)
        inv = jnp.minimum(jax.lax.rsqrt(f_sq * c_sq), jnp.float32(1.0 / _EPS))
        dist = 1.0 - dot * inv                          # (TN, 1)

        # Mask rows that fall past the real N (padding of the last tile).
        row = jax.lax.broadcasted_iota(jnp.int32, (tile_n, 1), 0)
        valid = (step * tile_n + row) < n_total
        acc_ref[...] += jnp.sum(jnp.where(valid, dist, jnp.float32(0.0)))

        @pl.when(step == pl.num_programs(0) - 1)
        def _finalize():
            o_ref[...] = acc_ref[...] * jnp.float32(inv_n)

    return kernel


def cosine_distance(feature: jax.Array, centroid: jax.Array, *, tile_n=None) -> jax.Array:
    """mean over dim=0 of (1 - cosine_similarity(feature, centroid, dim=1))."""
    feature = jnp.asarray(feature)
    centroid = jnp.asarray(centroid)
    if feature.ndim == 1:
        feature = feature[None, :]
    if centroid.ndim == 1:
        centroid = centroid[None, :]
    if feature.shape[1] != centroid.shape[1]:
        raise ValueError(f"dim mismatch: {feature.shape} vs {centroid.shape}")

    n = max(feature.shape[0], centroid.shape[0])
    d = feature.shape[1]

    # Rare broadcast direction (feature (1, D) vs centroid (N, D)): materialize feature.
    if feature.shape[0] == 1 and n > 1:
        feature = jnp.broadcast_to(feature, (n, d))
    # Common PyTorch case: centroid (1, D) -> keep UN-broadcast, resident block.
    shared_centroid = centroid.shape[0] == 1 and n > 1
    if not shared_centroid and centroid.shape[0] != n:
        raise ValueError(f"cannot broadcast centroid {centroid.shape} to {(n, d)}")

    itemsize = feature.dtype.itemsize

    # Tile sizing: ~4 MiB per feature buffer so 2 inputs x 2 pipeline buffers stay
    # comfortably inside the 32 MiB scoped VMEM limit on every generation
    # (v7x only has 64 MiB physical VMEM).
    if tile_n is None:
        bytes_per_row = max(1, d * itemsize)
        tile_n = (4 * 1024 * 1024) // bytes_per_row
    if tile_n >= n:
        tile_n = n                              # single full block (full-dim is always legal)
    else:
        tile_n = max(8, (int(tile_n) // 8) * 8)  # sublane-aligned tile

    num_tiles = pl.cdiv(n, tile_n)

    if shared_centroid:
        c_spec = pl.BlockSpec((1, d), lambda i: (0, 0))
        c_bytes = d * centroid.dtype.itemsize
    else:
        c_spec = pl.BlockSpec((tile_n, d), lambda i: (i, 0))
        c_bytes = n * d * centroid.dtype.itemsize

    kernel = _make_kernel(n, tile_n)

    cost = pl.CostEstimate(
        flops=5 * n * d,
        transcendentals=n,                      # one rsqrt per row
        bytes_accessed=n * d * itemsize + c_bytes + 4,
    )

    out = pl.pallas_call(
        kernel,
        out_shape=jax.ShapeDtypeStruct((1, 1), jnp.float32),
        grid=(num_tiles,),
        in_specs=[
            pl.BlockSpec((tile_n, d), lambda i: (i, 0)),
            c_spec,
        ],
        out_specs=pl.BlockSpec((1, 1), lambda i: (0, 0)),
        scratch_shapes=[pltpu.VMEM((1, 1), jnp.float32)],
        compiler_params=pltpu.CompilerParams(
            dimension_semantics=("arbitrary",),     # carried scalar accumulator
            vmem_limit_bytes=32 * 1024 * 1024,
        ),
        cost_estimate=cost,
    )(feature, centroid)
    return out[0, 0]


def _reference(feature, centroid):
    f = jnp.asarray(feature, jnp.float32)
    c = jnp.asarray(centroid, jnp.float32)
    shape = jnp.broadcast_shapes(f.shape, c.shape)
    f = jnp.broadcast_to(f, shape)
    c = jnp.broadcast_to(c, shape)
    dot = jnp.sum(f * c, axis=1)
    denom = jnp.maximum(jnp.linalg.norm(f, axis=1) * jnp.linalg.norm(c, axis=1), _EPS)
    return jnp.mean(1.0 - dot / denom)


if __name__ == "__main__":
    key = jax.random.PRNGKey(0)
    kf1, kc1, kf2, kc2 = jax.random.split(key, 4)

    # Case 1: paired (N, D) feature/centroid, auto tile (single full block).
    N1, D1 = 8, 32
    f1 = jax.random.normal(kf1, (N1, D1), dtype=jnp.float32)
    c1 = jax.random.normal(kc1, (N1, D1), dtype=jnp.float32)
    out1 = cosine_distance(f1, c1)
    jax.block_until_ready(out1)
    ref1 = _reference(f1, c1)

    # Case 2: shared (1, D) centroid (common PyTorch broadcast), small forced tile
    # so the grid has 3 steps and the last tile is padded + masked (N=20).
    N2, D2 = 20, 32
    f2 = jax.random.normal(kf2, (N2, D2), dtype=jnp.float32)
    c2 = jax.random.normal(kc2, (1, D2), dtype=jnp.float32)
    out2 = cosine_distance(f2, c2, tile_n=8)
    jax.block_until_ready(out2)
    ref2 = _reference(f2, c2)

    assert jnp.allclose(out1, ref1, atol=1e-5, rtol=1e-5), (out1, ref1)
    assert jnp.allclose(out2, ref2, atol=1e-5, rtol=1e-5), (out2, ref2)
    print("KERNEL_OK")
</pallas_src>

<mosaic_0001>
module attributes {stable_mosaic.version = 11 : i64} {
  func.func @kernel(%arg0: i32, %arg1: memref<8x32xf32, #tpu.memory_space<vmem>>, %arg2: memref<8x32xf32, #tpu.memory_space<vmem>>, %arg3: memref<1x1xf32, #tpu.memory_space<vmem>>, %arg4: memref<1x1xf32, #tpu.memory_space<vmem>>) attributes {dimension_semantics = [#tpu.dimension_semantics<arbitrary>], iteration_bounds = array<i64: 1>, scalar_prefetch = 0 : i64, scratch_operands = 1 : i64, tpu.core_type = #tpu.core_type<tc>, window_params = [{transform_indices = @transform_0, window_bounds = array<i64: 8, 32>}, {transform_indices = @transform_1, window_bounds = array<i64: 8, 32>}, {pipeline_mode = #tpu.pipeline_mode<synchronous>, transform_indices = @transform_2, window_bounds = array<i64: 1, 1>}]} {
    %c0_i32 = arith.constant 0 : i32
    %0 = arith.cmpi eq, %arg0, %c0_i32 : i32
    %1 = arith.extui %0 : i1 to i32
    %c0_i32_0 = arith.constant 0 : i32
    %2 = arith.cmpi ne, %1, %c0_i32_0 : i32
    scf.if %2 {
      %cst_17 = arith.constant 0.000000e+00 : f32
      %40 = vector.broadcast %cst_17 : f32 to vector<1x1xf32>
      %c0_18 = arith.constant 0 : index
      %c0_19 = arith.constant 0 : index
      %41 = vector.load %arg4[%c0_18, %c0_19] : memref<1x1xf32, #tpu.memory_space<vmem>>, vector<1x1xf32>
      tpu.vector_store %arg4[%c0_18, %c0_19], %40 {strides = array<i32>} : memref<1x1xf32, #tpu.memory_space<vmem>>, vector<1x1xf32>,
    } else {
    }
    %c0 = arith.constant 0 : index
    %c0_1 = arith.constant 0 : index
    %3 = vector.load %arg1[%c0, %c0_1] : memref<8x32xf32, #tpu.memory_space<vmem>>, vector<8x32xf32>
    %c0_2 = arith.constant 0 : index
    %c0_3 = arith.constant 0 : index
    %4 = vector.load %arg2[%c0_2, %c0_3] : memref<8x32xf32, #tpu.memory_space<vmem>>, vector<8x32xf32>
    %5 = arith.mulf %3, %4 : vector<8x32xf32>
    %cst = arith.constant dense<0.000000e+00> : vector<8xf32>
    %6 = vector.multi_reduction <add>, %5, %cst [1] : vector<8x32xf32> to vector<8xf32>
    %7 = vector.shape_cast %6 : vector<8xf32> to vector<8x1xf32>
    %8 = arith.mulf %3, %3 : vector<8x32xf32>
    %cst_4 = arith.constant dense<0.000000e+00> : vector<8xf32>
    %9 = vector.multi_reduction <add>, %8, %cst_4 [1] : vector<8x32xf32> to vector<8xf32>
    %10 = vector.shape_cast %9 : vector<8xf32> to vector<8x1xf32>
    %11 = arith.mulf %4, %4 : vector<8x32xf32>
    %cst_5 = arith.constant dense<0.000000e+00> : vector<8xf32>
    %12 = vector.multi_reduction <add>, %11, %cst_5 [1] : vector<8x32xf32> to vector<8xf32>
    %13 = vector.shape_cast %12 : vector<8xf32> to vector<8x1xf32>
    %14 = arith.mulf %10, %13 : vector<8x1xf32>
    %15 = math.rsqrt %14 : vector<8x1xf32>
    %cst_6 = arith.constant 1.000000e+08 : f32
    %16 = vector.broadcast %cst_6 : f32 to vector<8x1xf32>
    %17 = arith.minimumf %15, %16 : vector<8x1xf32>
    %18 = arith.mulf %7, %17 : vector<8x1xf32>
    %cst_7 = arith.constant 1.000000e+00 : f32
    %19 = vector.broadcast %cst_7 : f32 to vector<8x1xf32>
    %20 = arith.subf %19, %18 : vector<8x1xf32>
    %21 = tpu.iota {dimensions = array<i32: 0>} : vector<8x1xi32>
    %c8_i32 = arith.constant 8 : i32
    %22 = arith.muli %arg0, %c8_i32 : i32
    %23 = vector.broadcast %22 : i32 to vector<8x1xi32>
    %24 = arith.addi %23, %21 : vector<8x1xi32>
    %c8_i32_8 = arith.constant 8 : i32
    %25 = vector.broadcast %c8_i32_8 : i32 to vector<8x1xi32>
    %26 = arith.cmpi slt, %24, %25 : vector<8x1xi32>
    %c0_9 = arith.constant 0 : index
    %c0_10 = arith.constant 0 : index
    %27 = vector.load %arg4[%c0_9, %c0_10] : memref<1x1xf32, #tpu.memory_space<vmem>>, vector<1x1xf32>
    %cst_11 = arith.constant 0.000000e+00 : f32
    %28 = vector.broadcast %cst_11 : f32 to vector<8x1xf32>
    %29 = arith.select %26, %20, %28 : vector<8x1xi1>, vector<8x1xf32>
    %30 = vector.shape_cast %29 : vector<8x1xf32> to vector<1x8x1xf32>
    %cst_12 = arith.constant dense<0.000000e+00> : vector<1xf32>
    %31 = vector.multi_reduction <add>, %30, %cst_12 [1, 2] : vector<1x8x1xf32> to vector<1xf32>
    %32 = vector.shape_cast %31 : vector<1xf32> to vector<1x1x1xf32>
    %33 = vector.extract %32[0, 0, 0] : f32 from vector<1x1x1xf32>
    %34 = vector.broadcast %33 : f32 to vector<1x1xf32>
    %35 = arith.addf %27, %34 : vector<1x1xf32>
    %c0_13 = arith.constant 0 : index
    %c0_14 = arith.constant 0 : index
    %36 = vector.load %arg4[%c0_13, %c0_14] : memref<1x1xf32, #tpu.memory_space<vmem>>, vector<1x1xf32>
    tpu.vector_store %arg4[%c0_13, %c0_14], %35 {strides = array<i32>} : memref<1x1xf32, #tpu.memory_space<vmem>>, vector<1x1xf32>,
    %c0_i32_15 = arith.constant 0 : i32
    %37 = arith.cmpi eq, %arg0, %c0_i32_15 : i32
    %38 = arith.extui %37 : i1 to i32
    %c0_i32_16 = arith.constant 0 : i32
    %39 = arith.cmpi ne, %38, %c0_i32_16 : i32
    scf.if %39 {
      %c0_17 = arith.constant 0 : index
      %c0_18 = arith.constant 0 : index
      %40 = vector.load %arg4[%c0_17, %c0_18] : memref<1x1xf32, #tpu.memory_space<vmem>>, vector<1x1xf32>
      %cst_19 = arith.constant 1.250000e-01 : f32
      %41 = vector.broadcast %cst_19 : f32 to vector<1x1xf32>
      %42 = arith.mulf %40, %41 : vector<1x1xf32>
      %c0_20 = arith.constant 0 : index
      %c0_21 = arith.constant 0 : index
      %43 = vector.load %arg3[%c0_20, %c0_21] : memref<1x1xf32, #tpu.memory_space<vmem>>, vector<1x1xf32>
      tpu.vector_store %arg3[%c0_20, %c0_21], %42 {strides = array<i32>} : memref<1x1xf32, #tpu.memory_space<vmem>>, vector<1x1xf32>,
    } else {
    }
    return
  }
  func.func @transform_0(%arg0: i32) -> (i32, i32) {
    %c0_i32 = arith.constant 0 : i32
    %c0_i32_0 = arith.constant 0 : i32
    return %arg0, %c0_i32 : i32, i32
  }
  func.func @transform_1(%arg0: i32) -> (i32, i32) {
    %c0_i32 = arith.constant 0 : i32
    %c0_i32_0 = arith.constant 0 : i32
    return %arg0, %c0_i32 : i32, i32
  }
  func.func @transform_2(%arg0: i32) -> (i32, i32) {
    %c0_i32 = arith.constant 0 : i32
    %c0_i32_0 = arith.constant 0 : i32
    %c0_i32_1 = arith.constant 0 : i32
    return %c0_i32, %c0_i32_0 : i32, i32
  }
}

</mosaic_0001>

<llo_original>
// kernel: tpu_custom_call.1
$region0: #{tpu_custom_call.1}
  #allocation0 [shape = 'u32[]', space=smem, size = 0x4, offset = 0x4, fixed_abs, tag = 'smem constant byte address 0x4 - core index']
  #allocation1 [shape = 'u32[144,128]{1,0:T(1,128)}', space=vmem, size = 0x12000, scoped, tag = 'internal scratch']
  #allocation2 [shape = 'f32[1,1]{1,0:T(1,128)}', space=vmem, size = 0x200, scoped, tag = 'scratch operand']
  %s0 = inlined_call_operand.hbm [shape: f32[8,32], index: 0, kind: input, shape index: {}]
  %s1 = inlined_call_operand.hbm [shape: f32[8,32], index: 1, kind: input, shape index: {}]
  %s2 = inlined_call_operand.hbm [shape: f32[1,1], index: 2, kind: output, shape index: {}]
  %s3 = sld [smem:[#allocation0]]
  $region34: #{tpu_custom_call.1} parent=0
    _
  %s5 = ssub.s32 1, %s3
  %s6 = scalar_select 0, %s5, %s3
  $region1: #{tpu_custom_call.1} parent=0
    #allocation3 [shape = 'u8[4096]{0}', space=vmem, size = 0x1000, scoped, tag = 'input window, operand 0, single buffered']
    #allocation4 [shape = 's32[1]{0}', space=sflag, size = 0x4, scoped, tag = 'scoped memory for tpu_custom_call.1']
    #allocation5 [shape = 's32[1]{0}', space=sflag, size = 0x4, scoped, tag = 'scoped memory for tpu_custom_call.1']
    #allocation6 [shape = 'u8[4096]{0}', space=vmem, size = 0x1000, scoped, tag = 'input window, operand 1, single buffered']
    #allocation7 [shape = 's32[1]{0}', space=sflag, size = 0x4, scoped, tag = 'scoped memory for tpu_custom_call.1']
    #allocation8 [shape = 'u8[512]{0}', space=vmem, size = 0x400, scoped, tag = 'output window, operand 0, single buffered']
    %7 = vsyncpa [#allocation4], 0
    %8 = vsyncpa [#allocation7], 0
    %9 = vsyncpa [#allocation5], 0
    // Predicated region
    $region2: #{tpu_custom_call.1} parent=1 // pred_check
      _
    $region3: #{tpu_custom_call.1} parent=1 // pred_check_branch
      %11 = sbr.rel (0) target = $region5
    $region4: #{tpu_custom_call.1} parent=1 // pred_region
      %s13 = ssub.s32 128, 128
      %14 = vsyncadd [#allocation4], %s13
      %s16 = sshll.u32 [#allocation3], 4
      %s17 = int_to_ptr.vmem [resolvable:$true] %s16
      %19 = dma.hbm_to_vmem [thread:$0]  %s0, 128, %s17, [#allocation4]
    $region5: #{tpu_custom_call.1} parent=1 // pred_fallthru
      _
    // Predicated region
    $region6: #{tpu_custom_call.1} parent=1 // pred_check
      _
    $region7: #{tpu_custom_call.1} parent=1 // pred_check_branch
      %21 = sbr.rel (0) target = $region9
    $region8: #{tpu_custom_call.1} parent=1 // pred_region
      %s23 = ssub.s32 128, 128
      %24 = vsyncadd [#allocation7], %s23
      %s26 = sshll.u32 [#allocation6], 4
      %s27 = int_to_ptr.vmem [resolvable:$true] %s26
      %29 = dma.hbm_to_vmem [thread:$0]  %s1, 128, %s27, [#allocation7]
    $region9: #{tpu_custom_call.1} parent=1 // pred_fallthru
      _
    // Predicated region
    $region10: #{tpu_custom_call.1} parent=1 // pred_check
      _
    $region11: #{tpu_custom_call.1} parent=1 // pred_check_branch
      %31 = sbr.rel (0) target = $region13
    $region12: #{tpu_custom_call.1} parent=1 // pred_region
      %32 = dma.done [#allocation4], 128
    $region13: #{tpu_custom_call.1} parent=1 // pred_fallthru
      _
    // Predicated region
    $region14: #{tpu_custom_call.1} parent=1 // pred_check
      _
    $region15: #{tpu_custom_call.1} parent=1 // pred_check_branch
      %34 = sbr.rel (0) target = $region17
    $region16: #{tpu_custom_call.1} parent=1 // pred_region
      %35 = dma.done [#allocation7], 128
    $region17: #{tpu_custom_call.1} parent=1 // pred_fallthru
      _
    %p36 = scmp.eq.s32.totalorder 0, 0
    // Predicated region
    $region18: #{tpu_custom_call.1} parent=1 // pred_check
      %p37 = pneg %p36
    $region19: #{tpu_custom_call.1} parent=1 // pred_check_branch
      %39 = sbr.rel (%p37) target = $region21
    $region20: #{tpu_custom_call.1} parent=1 // pred_region
      %vm40 = vcmask 0
      %41 = vst.msk [vmem:[#allocation2] sm:$0x1] %vm40, 0.0
    $region21: #{tpu_custom_call.1} parent=1 // pred_fallthru
      _
    %v42 = vld [vmem:[#allocation3] sm:$0xff]
    %v43 = vld [vmem:[#allocation6] sm:$0xff]
    %v44 = vmul.f32 %v42, %v43
    %vm45 = vcmask 261120
    %v46 = vsel %vm45, %v44, 0.0
    %47 = vadd.xlane.f32.xlu0 %v46
    %v48 = vpop.xlane.xlu0 %47
    %v49 = vmul.f32 %v42, %v42
    %v50 = vsel %vm45, %v49, 0.0
    %51 = vadd.xlane.f32.xlu0 %v50
    %v52 = vpop.xlane.xlu0 %51
    %v53 = vmul.f32 %v43, %v43
    %v54 = vsel %vm45, %v53, 0.0
    %55 = vadd.xlane.f32.xlu0 %v54
    %v56 = vpop.xlane.xlu0 %55
    %v57 = vmul.f32 %v52, %v56
    %v58 = vrsqrt.pop %v57
    %v59 = vmin.f32 %v58, 1e+08
    %v60 = vmul.f32 %v48, %v59
    %v61 = vsub.f32 1.0, %v60
    %v62 = vlaneseq
    %v63 = vshrl.u32 %v62, 7
    %s64 = smul.u32 0, 8
    %v65 = vstv %s64
    %v66 = vadd.s32 %v65, %v63
    %vm67 = vcmp.lt.s32.totalorder %v66, 8
    %v68 = vld [vmem:[#allocation2] sm:$0x1]
    %v69 = vsel %vm67, %v61, 0.0
    %vm70 = vcmask 7168
    %v71 = vsel %vm70, %v69, 0.0
    %72 = vadd.xlane.f32.xlu0 %v71
    %v73 = vpop.xlane.xlu0 %72
    %v74 = vrot.slane %v73, 4
    %v75 = vadd.f32 %v73, %v74
    %v76 = vrot.slane %v75, 2
    %v77 = vadd.f32 %v75, %v76
    %v78 = vrot.slane %v77, 1
    %v79 = vadd.f32 %v77, %v78
    %s80 = vtos %v79
    %v81 = vstv %s80
    %v82 = vadd.f32 %v68, %v81
    %vm83 = vcmask 0
    %84 = vst.msk [vmem:[#allocation2] sm:$0x1] %vm83, %v82
    // Predicated region
    $region22: #{tpu_custom_call.1} parent=1 // pred_check
      %p85 = pneg %p36
    $region23: #{tpu_custom_call.1} parent=1 // pred_check_branch
      %87 = sbr.rel (%p85) target = $region25
    $region24: #{tpu_custom_call.1} parent=1 // pred_region
      %v88 = vld [vmem:[#allocation2] sm:$0x1]
      %v89 = vmul.f32 %v88, 0.125
      %90 = vst.msk [vmem:[#allocation8] sm:$0x1] %vm83, %v89
    $region25: #{tpu_custom_call.1} parent=1 // pred_fallthru
      _
    // Predicated region
    $region26: #{tpu_custom_call.1} parent=1 // pred_check
      _
    $region27: #{tpu_custom_call.1} parent=1 // pred_check_branch
      %92 = sbr.rel (0) target = $region29
    $region28: #{tpu_custom_call.1} parent=1 // pred_region
      %s94 = ssub.s32 16, 16
      %95 = vsyncadd [#allocation5], %s94
      %s97 = sshll.u32 [#allocation8], 4
      %s98 = int_to_ptr.vmem [resolvable:$true] %s97
      %100 = dma.vmem_to_hbm [thread:$0]  %s98, 16, %s2, [#allocation5]
    $region29: #{tpu_custom_call.1} parent=1 // pred_fallthru
      _
    // Predicated region
    $region30: #{tpu_custom_call.1} parent=1 // pred_check
      _
    $region31: #{tpu_custom_call.1} parent=1 // pred_check_branch
      %102 = sbr.rel (0) target = $region33
    $region32: #{tpu_custom_call.1} parent=1 // pred_region
      %103 = dma.done [#allocation5], 16
    $region33: #{tpu_custom_call.1} parent=1 // pred_fallthru
      _
    %104 = vsyncpa [#allocation4], 1
    %105 = vsyncpa [#allocation7], 1
    %106 = vsyncpa [#allocation5], 1

</llo_original>
